<compile_context>
chip_gen: v6e
topology: v6e:2x2x1
jax: 0.10.0
libtpu: 0.0.40
codegen_flags: <defaults>
</compile_context>

<pallas_src>
import jax
import jax.numpy as jnp
from jax.experimental import pallas as pl
from jax.experimental.pallas import tpu as pltpu

D = 115          # d_model / input_size
OUT = 19         # output_size (logits); value is packed at lane index OUT
DP = 128         # padded feature / lane width
N_LAYERS = 5     # fc0, fc1, (attn1·fc2), (attn2·fc3), (attn3·[fc4|value])
_MAX_BATCH_BLOCK = 1024   # per-step overhead amortizes by ~512-1024 rows


def model_kernel(x_ref, w_ref, b_ref, out_ref):
    # x_ref:  [tb, 115] f32   activation tile (unpadded lanes)
    # w_ref:  [5, 128, 128] bf16  VMEM-resident packed fused-weight slab
    # b_ref:  [5, 128] f32        packed bias slab
    # out_ref:[tb, 128] f32       lane-dense output (logits | value | zero pad)
    # Cast + pad 115 -> 128 lanes inside VMEM (replaces the old host-side pad).
    x = jnp.pad(x_ref[...].astype(jnp.bfloat16), ((0, 0), (0, DP - D)))
    h = None
    for i in range(N_LAYERS):                     # static unroll: 5 chained MXU matmuls
        h = jnp.dot(x, w_ref[i], preferred_element_type=jnp.float32)  # bf16 in, f32 acc
        h = jnp.maximum(h + b_ref[i:i + 1, :], 0.0)                   # bias + ReLU in f32
        if i < N_LAYERS - 1:
            x = h.astype(jnp.bfloat16)            # back to bf16 for the next MXU pass
    out_ref[...] = h                              # lane-dense f32 store


def init_params(key):
    """Deterministic parameter init mimicking PyTorch Linear / MHA shapes."""
    params = {}

    def linear(key, fan_in, fan_out):
        kw, kb = jax.random.split(key)
        bound = 1.0 / jnp.sqrt(fan_in)
        # stored as [in, out] (i.e. W.T relative to PyTorch's [out, in])
        w = jax.random.uniform(kw, (fan_in, fan_out), jnp.float32, -bound, bound)
        b = jax.random.uniform(kb, (1, fan_out), jnp.float32, -bound, bound)
        return w, b

    keys = jax.random.split(key, 12)
    params["fc0"] = linear(keys[0], D, D)
    params["fc1"] = linear(keys[1], D, D)
    params["fc2"] = linear(keys[2], D, D)
    params["fc3"] = linear(keys[3], D, D)
    params["fc4"] = linear(keys[4], D, OUT)
    params["value"] = linear(keys[5], D, 1)

    def mha(key):
        # PyTorch MultiheadAttention: in_proj_weight [3D, D], in_proj_bias [3D],
        # out_proj: Linear(D, D).  With L=1 only the V slice + out_proj matter.
        # TODO(synk): torch uses xavier_uniform_ + zero in_proj_bias; init scheme is
        # irrelevant to the kernel math, kept simple here.
        k1, k2, k3 = jax.random.split(key, 3)
        bound = 1.0 / jnp.sqrt(D)
        in_proj_w = jax.random.uniform(k1, (3 * D, D), jnp.float32, -bound, bound)
        in_proj_b = jax.random.uniform(k2, (3 * D,), jnp.float32, -bound, bound)
        wo, bo = linear(k3, D, D)
        wv = in_proj_w[2 * D:3 * D, :].T          # [in, out]
        bv = in_proj_b[2 * D:3 * D].reshape(1, D)
        return wv, bv, wo, bo

    params["attn1"] = mha(keys[6])
    params["attn2"] = mha(keys[7])
    params["attn3"] = mha(keys[8])
    return params


def fuse_and_pack_params(params):
    """Fold the (purely linear) attention blocks into the next linear layer, concat
    the two heads, zero-pad to 128 lanes and pack into a bf16 weight slab [5,128,128]
    plus an f32 bias slab [5,128].  Fusion is done in f32; a single bf16 cast at the end."""
    def attn_lin(attn):
        wv, bv, wo, bo = attn                     # attn(x) = (x@wv+bv)@wo+bo
        return wv @ wo, bv @ wo + bo              # = x@Wa + ba

    layers = [params["fc0"], params["fc1"]]

    Wa1, ba1 = attn_lin(params["attn1"])
    W2, b2 = params["fc2"]
    layers.append((Wa1 @ W2, ba1 @ W2 + b2))

    Wa2, ba2 = attn_lin(params["attn2"])
    W3, b3 = params["fc3"]
    layers.append((Wa2 @ W3, ba2 @ W3 + b3))

    Wa3, ba3 = attn_lin(params["attn3"])
    W4, b4 = params["fc4"]
    Wv, bv = params["value"]
    Wcat = jnp.concatenate([W4, Wv], axis=1)      # [D, 20]  (logits | value)
    bcat = jnp.concatenate([b4, bv], axis=1)      # [1, 20]
    layers.append((Wa3 @ Wcat, ba3 @ Wcat + bcat))

    w_slab = jnp.zeros((N_LAYERS, DP, DP), jnp.float32)
    b_slab = jnp.zeros((N_LAYERS, DP), jnp.float32)
    for i, (W, b) in enumerate(layers):
        w_slab = w_slab.at[i, :W.shape[0], :W.shape[1]].set(W)
        b_slab = b_slab.at[i, :b.shape[1]].set(b[0])
    return w_slab.astype(jnp.bfloat16), b_slab


def _round_up(x, m):
    return ((x + m - 1) // m) * m


def _pick_tile(B):
    if B <= 8:
        return B                                  # single block == full array dims
    # >= 2 grid steps so the "parallel" axis can shard across v7x's 2 TensorCores;
    # capped so big batches pipeline in ~1024-row tiles (near HBM-roofline tile size).
    return min(_MAX_BATCH_BLOCK, _round_up(pl.cdiv(B, 2), 8))


@jax.jit
def forward_pallas(obs, w_slab, b_slab):
    obs = obs.astype(jnp.float32)                 # no-op if already f32
    B = obs.shape[0]
    tb = _pick_tile(B)
    grid = (pl.cdiv(B, tb),)                      # partial last block handles remainder

    out = pl.pallas_call(
        model_kernel,
        out_shape=jax.ShapeDtypeStruct((B, DP), jnp.float32),
        grid_spec=pltpu.PrefetchScalarGridSpec(
            num_scalar_prefetch=0,
            grid=grid,
            in_specs=[
                pl.BlockSpec((tb, D), lambda i: (i, 0)),                # obs, unpadded
                pl.BlockSpec((N_LAYERS, DP, DP), lambda i: (0, 0, 0)),  # weights (resident)
                pl.BlockSpec((N_LAYERS, DP), lambda i: (0, 0)),         # biases  (resident)
            ],
            out_specs=pl.BlockSpec((tb, DP), lambda i: (i, 0)),
        ),
        compiler_params=pltpu.CompilerParams(
            dimension_semantics=("parallel",)),
    )(obs, w_slab, b_slab)
    # Packed output: lanes [0:19] = logits, lane 19 = value, lanes >=20 zero.
    return out


def forward_ref(obs, params):
    """Pure-JAX f32 reference of the PyTorch forward (unfused, seq_len==1 attention)."""
    def lin(x, wb):
        return x @ wb[0] + wb[1]

    x = jax.nn.relu(lin(obs, params["fc0"]))
    x = jax.nn.relu(lin(x, params["fc1"]))
    wv, bv, wo, bo = params["attn1"]
    x = (x @ wv + bv) @ wo + bo
    x = jax.nn.relu(lin(x, params["fc2"]))
    wv, bv, wo, bo = params["attn2"]
    x = (x @ wv + bv) @ wo + bo
    x = jax.nn.relu(lin(x, params["fc3"]))
    wv, bv, wo, bo = params["attn3"]
    x = (x @ wv + bv) @ wo + bo
    logits = jax.nn.relu(lin(x, params["fc4"]))
    value = jax.nn.relu(lin(x, params["value"]))[:, 0]
    return logits, value


if __name__ == "__main__":
    key = jax.random.PRNGKey(0)
    k_par, k_obs_a, k_obs_b = jax.random.split(key, 3)
    params = init_params(k_par)
    w_slab, b_slab = fuse_and_pack_params(params)

    # B=8: single-block small-batch path.  B=53: multi-step grid + partial last block.
    for B, k_obs in ((8, k_obs_a), (53, k_obs_b)):
        obs = jax.random.normal(k_obs, (B, D), dtype=jnp.float32)
        out = jax.block_until_ready(forward_pallas(obs, w_slab, b_slab))
        logits, value = out[:, :OUT], out[:, OUT]     # split packed head at the consumer
        ref_logits, ref_value = forward_ref(obs, params)

        assert logits.shape == (B, OUT) and value.shape == (B,)
        # bf16 weights/activations (f32 accumulation) => ~1e-3 abs error; 2e-2 tolerance.
        assert jnp.allclose(logits, ref_logits, atol=2e-2, rtol=2e-2)
        assert jnp.allclose(value, ref_value, atol=2e-2, rtol=2e-2)

    print("KERNEL_OK")
</pallas_src>

<mosaic_0001>
module attributes {stable_mosaic.version = 11 : i64} {
  func.func @model_kernel(%arg0: i32, %arg1: memref<8x115xf32, #tpu.memory_space<vmem>>, %arg2: memref<5x128x128xbf16, #tpu.memory_space<vmem>>, %arg3: memref<5x128xf32, #tpu.memory_space<vmem>>, %arg4: memref<8x128xf32, #tpu.memory_space<vmem>>) attributes {dimension_semantics = [#tpu.dimension_semantics<parallel>], iteration_bounds = array<i64: 1>, scalar_prefetch = 0 : i64, scratch_operands = 0 : i64, tpu.core_type = #tpu.core_type<tc>, window_params = [{transform_indices = @transform_0, window_bounds = array<i64: 8, 115>}, {pipeline_mode = #tpu.pipeline_mode<synchronous>, transform_indices = @transform_1, window_bounds = array<i64: 5, 128, 128>}, {pipeline_mode = #tpu.pipeline_mode<synchronous>, transform_indices = @transform_2, window_bounds = array<i64: 5, 128>}, {transform_indices = @transform_3, window_bounds = array<i64: 8, 128>}]} {
    %c0 = arith.constant 0 : index
    %c0_0 = arith.constant 0 : index
    %0 = vector.load %arg1[%c0, %c0_0] : memref<8x115xf32, #tpu.memory_space<vmem>>, vector<8x115xf32>
    %1 = arith.truncf %0 : vector<8x115xf32> to vector<8x115xbf16>
    %c0_i32 = arith.constant 0 : i32
    %2 = arith.sitofp %c0_i32 : i32 to bf16
    %3 = vector.broadcast %2 : bf16 to vector<8x13xbf16>
    %4 = tpu.concatenate %1, %3 in 1 : vector<8x115xbf16>, vector<8x13xbf16> -> vector<8x128xbf16>
    %c0_1 = arith.constant 0 : index
    %c0_2 = arith.constant 0 : index
    %c0_3 = arith.constant 0 : index
    %5 = vector.load %arg2[%c0_1, %c0_2, %c0_3] : memref<5x128x128xbf16, #tpu.memory_space<vmem>>, vector<1x128x128xbf16>
    %6 = vector.shape_cast %5 : vector<1x128x128xbf16> to vector<128x128xbf16>
    %cst = arith.constant dense<0.000000e+00> : vector<8x128xf32>
    %7 = tpu.matmul %4, %6, %cst {dimension_numbers = #tpu.dot_dimension_numbers<[1], [0], [0], [1], [0, 0, 1, 1], [], []>} : vector<8x128xbf16>, vector<128x128xbf16>, vector<8x128xf32> -> vector<8x128xf32>
    %c0_4 = arith.constant 0 : index
    %c0_5 = arith.constant 0 : index
    %8 = vector.load %arg3[%c0_4, %c0_5] : memref<5x128xf32, #tpu.memory_space<vmem>>, vector<1x128xf32>
    %9 = vector.broadcast %8 : vector<1x128xf32> to vector<8x128xf32>
    %10 = arith.addf %7, %9 : vector<8x128xf32>
    %cst_6 = arith.constant 0.000000e+00 : f32
    %11 = vector.broadcast %cst_6 : f32 to vector<8x128xf32>
    %12 = arith.maximumf %10, %11 : vector<8x128xf32>
    %13 = arith.truncf %12 : vector<8x128xf32> to vector<8x128xbf16>
    %c1 = arith.constant 1 : index
    %c0_7 = arith.constant 0 : index
    %c0_8 = arith.constant 0 : index
    %14 = vector.load %arg2[%c1, %c0_7, %c0_8] : memref<5x128x128xbf16, #tpu.memory_space<vmem>>, vector<1x128x128xbf16>
    %15 = vector.shape_cast %14 : vector<1x128x128xbf16> to vector<128x128xbf16>
    %cst_9 = arith.constant dense<0.000000e+00> : vector<8x128xf32>
    %16 = tpu.matmul %13, %15, %cst_9 {dimension_numbers = #tpu.dot_dimension_numbers<[1], [0], [0], [1], [0, 0, 1, 1], [], []>} : vector<8x128xbf16>, vector<128x128xbf16>, vector<8x128xf32> -> vector<8x128xf32>
    %c1_10 = arith.constant 1 : index
    %c0_11 = arith.constant 0 : index
    %17 = vector.load %arg3[%c1_10, %c0_11] : memref<5x128xf32, #tpu.memory_space<vmem>>, vector<1x128xf32>
    %18 = vector.broadcast %17 : vector<1x128xf32> to vector<8x128xf32>
    %19 = arith.addf %16, %18 : vector<8x128xf32>
    %cst_12 = arith.constant 0.000000e+00 : f32
    %20 = vector.broadcast %cst_12 : f32 to vector<8x128xf32>
    %21 = arith.maximumf %19, %20 : vector<8x128xf32>
    %22 = arith.truncf %21 : vector<8x128xf32> to vector<8x128xbf16>
    %c2 = arith.constant 2 : index
    %c0_13 = arith.constant 0 : index
    %c0_14 = arith.constant 0 : index
    %23 = vector.load %arg2[%c2, %c0_13, %c0_14] : memref<5x128x128xbf16, #tpu.memory_space<vmem>>, vector<1x128x128xbf16>
    %24 = vector.shape_cast %23 : vector<1x128x128xbf16> to vector<128x128xbf16>
    %cst_15 = arith.constant dense<0.000000e+00> : vector<8x128xf32>
    %25 = tpu.matmul %22, %24, %cst_15 {dimension_numbers = #tpu.dot_dimension_numbers<[1], [0], [0], [1], [0, 0, 1, 1], [], []>} : vector<8x128xbf16>, vector<128x128xbf16>, vector<8x128xf32> -> vector<8x128xf32>
    %c2_16 = arith.constant 2 : index
    %c0_17 = arith.constant 0 : index
    %26 = vector.load %arg3[%c2_16, %c0_17] : memref<5x128xf32, #tpu.memory_space<vmem>>, vector<1x128xf32>
    %27 = vector.broadcast %26 : vector<1x128xf32> to vector<8x128xf32>
    %28 = arith.addf %25, %27 : vector<8x128xf32>
    %cst_18 = arith.constant 0.000000e+00 : f32
    %29 = vector.broadcast %cst_18 : f32 to vector<8x128xf32>
    %30 = arith.maximumf %28, %29 : vector<8x128xf32>
    %31 = arith.truncf %30 : vector<8x128xf32> to vector<8x128xbf16>
    %c3 = arith.constant 3 : index
    %c0_19 = arith.constant 0 : index
    %c0_20 = arith.constant 0 : index
    %32 = vector.load %arg2[%c3, %c0_19, %c0_20] : memref<5x128x128xbf16, #tpu.memory_space<vmem>>, vector<1x128x128xbf16>
    %33 = vector.shape_cast %32 : vector<1x128x128xbf16> to vector<128x128xbf16>
    %cst_21 = arith.constant dense<0.000000e+00> : vector<8x128xf32>
    %34 = tpu.matmul %31, %33, %cst_21 {dimension_numbers = #tpu.dot_dimension_numbers<[1], [0], [0], [1], [0, 0, 1, 1], [], []>} : vector<8x128xbf16>, vector<128x128xbf16>, vector<8x128xf32> -> vector<8x128xf32>
    %c3_22 = arith.constant 3 : index
    %c0_23 = arith.constant 0 : index
    %35 = vector.load %arg3[%c3_22, %c0_23] : memref<5x128xf32, #tpu.memory_space<vmem>>, vector<1x128xf32>
    %36 = vector.broadcast %35 : vector<1x128xf32> to vector<8x128xf32>
    %37 = arith.addf %34, %36 : vector<8x128xf32>
    %cst_24 = arith.constant 0.000000e+00 : f32
    %38 = vector.broadcast %cst_24 : f32 to vector<8x128xf32>
    %39 = arith.maximumf %37, %38 : vector<8x128xf32>
    %40 = arith.truncf %39 : vector<8x128xf32> to vector<8x128xbf16>
    %c4 = arith.constant 4 : index
    %c0_25 = arith.constant 0 : index
    %c0_26 = arith.constant 0 : index
    %41 = vector.load %arg2[%c4, %c0_25, %c0_26] : memref<5x128x128xbf16, #tpu.memory_space<vmem>>, vector<1x128x128xbf16>
    %42 = vector.shape_cast %41 : vector<1x128x128xbf16> to vector<128x128xbf16>
    %cst_27 = arith.constant dense<0.000000e+00> : vector<8x128xf32>
    %43 = tpu.matmul %40, %42, %cst_27 {dimension_numbers = #tpu.dot_dimension_numbers<[1], [0], [0], [1], [0, 0, 1, 1], [], []>} : vector<8x128xbf16>, vector<128x128xbf16>, vector<8x128xf32> -> vector<8x128xf32>
    %c4_28 = arith.constant 4 : index
    %c0_29 = arith.constant 0 : index
    %44 = vector.load %arg3[%c4_28, %c0_29] : memref<5x128xf32, #tpu.memory_space<vmem>>, vector<1x128xf32>
    %45 = vector.broadcast %44 : vector<1x128xf32> to vector<8x128xf32>
    %46 = arith.addf %43, %45 : vector<8x128xf32>
    %cst_30 = arith.constant 0.000000e+00 : f32
    %47 = vector.broadcast %cst_30 : f32 to vector<8x128xf32>
    %48 = arith.maximumf %46, %47 : vector<8x128xf32>
    %c0_31 = arith.constant 0 : index
    %c0_32 = arith.constant 0 : index
    %49 = vector.load %arg4[%c0_31, %c0_32] : memref<8x128xf32, #tpu.memory_space<vmem>>, vector<8x128xf32>
    tpu.vector_store %arg4[%c0_31, %c0_32], %48 {strides = array<i32>} : memref<8x128xf32, #tpu.memory_space<vmem>>, vector<8x128xf32>,
    return
  }
  func.func @transform_0(%arg0: i32) -> (i32, i32) {
    %c0_i32 = arith.constant 0 : i32
    %c0_i32_0 = arith.constant 0 : i32
    return %arg0, %c0_i32 : i32, i32
  }
  func.func @transform_1(%arg0: i32) -> (i32, i32, i32) {
    %c0_i32 = arith.constant 0 : i32
    %c0_i32_0 = arith.constant 0 : i32
    %c0_i32_1 = arith.constant 0 : i32
    %c0_i32_2 = arith.constant 0 : i32
    return %c0_i32, %c0_i32_0, %c0_i32_1 : i32, i32, i32
  }
  func.func @transform_2(%arg0: i32) -> (i32, i32) {
    %c0_i32 = arith.constant 0 : i32
    %c0_i32_0 = arith.constant 0 : i32
    %c0_i32_1 = arith.constant 0 : i32
    return %c0_i32, %c0_i32_0 : i32, i32
  }
  func.func @transform_3(%arg0: i32) -> (i32, i32) {
    %c0_i32 = arith.constant 0 : i32
    %c0_i32_0 = arith.constant 0 : i32
    return %arg0, %c0_i32 : i32, i32
  }
}

</mosaic_0001>

<llo_original>
// kernel: forward_pallas.1
$region0: #{forward_pallas.1}
  #allocation0 [shape = 'u32[]', space=smem, size = 0x4, offset = 0x4, fixed_abs, tag = 'smem constant byte address 0x4 - core index']
  #allocation1 [shape = 'u32[144,128]{1,0:T(1,128)}', space=vmem, size = 0x12000, scoped, tag = 'internal scratch']
  %s0 = inlined_call_operand.hbm [shape: f32[8,115], index: 0, kind: input, shape index: {}]
  %s1 = inlined_call_operand.hbm [shape: bf16[5,128,128], index: 1, kind: input, shape index: {}]
  %s2 = inlined_call_operand.hbm [shape: f32[5,128], index: 2, kind: input, shape index: {}]
  %s3 = inlined_call_operand.hbm [shape: f32[8,128], index: 3, kind: output, shape index: {}]
  %s4 = sld [smem:[#allocation0]]
  $region34: #{forward_pallas.1} parent=0
    _
  %s6 = ssub.s32 1, %s4
  %s7 = scalar_select 0, %s6, %s4
  $region1: #{forward_pallas.1} parent=0
    #allocation2 [shape = 'u8[4096]{0}', space=vmem, size = 0x1000, scoped, tag = 'input window, operand 0, single buffered']
    #allocation3 [shape = 's32[1]{0}', space=sflag, size = 0x4, scoped, tag = 'scoped memory for forward_pallas.1']
    #allocation4 [shape = 's32[1]{0}', space=sflag, size = 0x4, scoped, tag = 'scoped memory for forward_pallas.1']
    #allocation5 [shape = 'u8[163840]{0}', space=vmem, size = 0x28000, scoped, tag = 'input window, operand 1, single buffered']
    #allocation6 [shape = 's32[1]{0}', space=sflag, size = 0x4, scoped, tag = 'scoped memory for forward_pallas.1']
    #allocation7 [shape = 'u8[4096]{0}', space=vmem, size = 0x1000, scoped, tag = 'input window, operand 2, single buffered']
    #allocation8 [shape = 'u8[4096]{0}', space=vmem, size = 0x1000, scoped, tag = 'output window, operand 0, single buffered']
    %8 = vsyncpa [#allocation3], 0
    %9 = vsyncpa [#allocation6], 0
    %10 = vsyncpa [#allocation4], 0
    // Predicated region
    $region2: #{forward_pallas.1} parent=1 // pred_check
      _
    $region3: #{forward_pallas.1} parent=1 // pred_check_branch
      %12 = sbr.rel (0) target = $region5
    $region4: #{forward_pallas.1} parent=1 // pred_region
      %s14 = ssub.s32 128, 128
      %15 = vsyncadd [#allocation3], %s14
      %s17 = sshll.u32 [#allocation2], 4
      %s18 = int_to_ptr.vmem [resolvable:$true] %s17
      %20 = dma.hbm_to_vmem [thread:$0]  %s0, 128, %s18, [#allocation3]
    $region5: #{forward_pallas.1} parent=1 // pred_fallthru
      _
    // Predicated region
    $region6: #{forward_pallas.1} parent=1 // pred_check
      _
    $region7: #{forward_pallas.1} parent=1 // pred_check_branch
      %22 = sbr.rel (0) target = $region9
    $region8: #{forward_pallas.1} parent=1 // pred_region
      %s24 = ssub.s32 5120, 5120
      %25 = vsyncadd [#allocation6], %s24
      %s26 = sshll.u32 [#allocation5], 4
      %s27 = int_to_ptr.vmem [resolvable:$true] %s26
      %32 = dma.hbm_to_vmem [thread:$0]  %s1, 5120, %s27, [#allocation6], 64, 64, 4
    $region9: #{forward_pallas.1} parent=1 // pred_fallthru
      _
    // Predicated region
    $region10: #{forward_pallas.1} parent=1 // pred_check
      _
    $region11: #{forward_pallas.1} parent=1 // pred_check_branch
      %34 = sbr.rel (0) target = $region13
    $region12: #{forward_pallas.1} parent=1 // pred_region
      %s36 = ssub.s32 128, 128
      %37 = vsyncadd [#allocation6], %s36
      %s39 = sshll.u32 [#allocation7], 4
      %s40 = int_to_ptr.vmem [resolvable:$true] %s39
      %42 = dma.hbm_to_vmem [thread:$0]  %s2, 128, %s40, [#allocation6]
    $region13: #{forward_pallas.1} parent=1 // pred_fallthru
      _
    // Predicated region
    $region14: #{forward_pallas.1} parent=1 // pred_check
      _
    $region15: #{forward_pallas.1} parent=1 // pred_check_branch
      %44 = sbr.rel (0) target = $region17
    $region16: #{forward_pallas.1} parent=1 // pred_region
      %45 = dma.done [#allocation3], 128
    $region17: #{forward_pallas.1} parent=1 // pred_fallthru
      _
    // Predicated region
    $region18: #{forward_pallas.1} parent=1 // pred_check
      _
    $region19: #{forward_pallas.1} parent=1 // pred_check_branch
      %47 = sbr.rel (0) target = $region21
    $region20: #{forward_pallas.1} parent=1 // pred_region
      %48 = dma.done [#allocation6], 5120
    $region21: #{forward_pallas.1} parent=1 // pred_fallthru
      _
    // Predicated region
    $region22: #{forward_pallas.1} parent=1 // pred_check
      _
    $region23: #{forward_pallas.1} parent=1 // pred_check_branch
      %50 = sbr.rel (0) target = $region25
    $region24: #{forward_pallas.1} parent=1 // pred_region
      %51 = dma.done [#allocation6], 128
    $region25: #{forward_pallas.1} parent=1 // pred_fallthru
      _
    %v53 = vld [vmem:[#allocation2] sm:$0xff]
    %v54 = vpack.c.bf16 %v53, %v53
    %vm55 = vcmask 941056
    %v58 = vsel %vm55, %v54, 0
    %v60 = vld [vmem:[#allocation5] sm:$0xf]
    %v61 = vld [vmem:[#allocation5 + $0x4] sm:$0xf]
    %v62 = vld [vmem:[#allocation5 + $0x8] sm:$0xf]
    %v63 = vld [vmem:[#allocation5 + $0xc] sm:$0xf]
    %v64 = vld [vmem:[#allocation5 + $0x10] sm:$0xf]
    %v65 = vld [vmem:[#allocation5 + $0x14] sm:$0xf]
    %v66 = vld [vmem:[#allocation5 + $0x18] sm:$0xf]
    %v67 = vld [vmem:[#allocation5 + $0x1c] sm:$0xf]
    %v68 = vld [vmem:[#allocation5 + $0x20] sm:$0xf]
    %v69 = vld [vmem:[#allocation5 + $0x24] sm:$0xf]
    %v70 = vld [vmem:[#allocation5 + $0x28] sm:$0xf]
    %v71 = vld [vmem:[#allocation5 + $0x2c] sm:$0xf]
    %v72 = vld [vmem:[#allocation5 + $0x30] sm:$0xf]
    %v73 = vld [vmem:[#allocation5 + $0x34] sm:$0xf]
    %v74 = vld [vmem:[#allocation5 + $0x38] sm:$0xf]
    %v75 = vld [vmem:[#allocation5 + $0x3c] sm:$0xf]
    %v76 = vld [vmem:[#allocation7] sm:$0x1]
    %v77 = vlaneseq
    %v78 = vshrl.u32 %v77, 7
    %v79 = vsub.s32 0, %v78
    %v80 = vrot.slane %v76, %v79
    %v97 = vunpack.c.l.b16 %v60
    %v98 = vunpack.c.l.b16 %v61
    %v99 = vunpack.c.l.b16 %v62
    %v100 = vunpack.c.l.b16 %v63
    %v101 = vunpack.c.l.b16 %v64
    %v102 = vunpack.c.l.b16 %v65
    %v103 = vunpack.c.l.b16 %v66
    %v104 = vunpack.c.l.b16 %v67
    %v105 = vunpack.c.l.b16 %v68
    %v106 = vunpack.c.l.b16 %v69
    %v107 = vunpack.c.l.b16 %v70
    %v108 = vunpack.c.l.b16 %v71
    %v109 = vunpack.c.l.b16 %v72
    %v110 = vunpack.c.l.b16 %v73
    %v111 = vunpack.c.l.b16 %v74
    %v112 = vunpack.c.l.b16 %v75
    %v113 = vpack.c.b16 %v98, %v97
    %v114 = vpack.c.b16 %v100, %v99
    %v115 = vpack.c.b16 %v102, %v101
    %v116 = vpack.c.b16 %v104, %v103
    %v117 = vpack.c.b16 %v106, %v105
    %v118 = vpack.c.b16 %v108, %v107
    %v119 = vpack.c.b16 %v110, %v109
    %v120 = vpack.c.b16 %v112, %v111
    %129 = vmatprep.subr.bf16.mxu0 0
    %130 = vmatpush1.bf16.msra.mxu0 %v120
    %131 = vmatprep.subr.bf16.mxu0 0
    %132 = vmatpush1.bf16.msra.mxu0 %v119
    %133 = vmatprep.subr.bf16.mxu0 0
    %134 = vmatpush1.bf16.msra.mxu0 %v118
    %135 = vmatprep.subr.bf16.mxu0 0
    %136 = vmatpush1.bf16.msra.mxu0 %v117
    %137 = vmatprep.subr.bf16.mxu0 0
    %138 = vmatpush1.bf16.msra.mxu0 %v116
    %139 = vmatprep.subr.bf16.mxu0 0
    %140 = vmatpush1.bf16.msra.mxu0 %v115
    %141 = vmatprep.subr.bf16.mxu0 0
    %142 = vmatpush1.bf16.msra.mxu0 %v114
    %143 = vmatprep.subr.bf16.mxu0 0
    %144 = vmatpush1.bf16.msra.mxu0 %v113
    %145 = vmatprep.subr.bf16.mxu0 0
    %146 = vmatpush2.bf16.msra.mxu0 0
    %147 = vmatprep.subr.bf16.mxu0 0
    %148 = vmatpush2.bf16.msra.mxu0 0
    %149 = vmatprep.subr.bf16.mxu0 0
    %150 = vmatpush2.bf16.msra.mxu0 0
    %151 = vmatprep.subr.bf16.mxu0 0
    %152 = vmatpush2.bf16.msra.mxu0 0
    %153 = vmatprep.subr.bf16.mxu0 0
    %154 = vmatpush2.bf16.msra.mxu0 0
    %155 = vmatprep.subr.bf16.mxu0 0
    %156 = vmatpush2.bf16.msra.mxu0 0
    %157 = vmatprep.subr.bf16.mxu0 0
    %158 = vmatpush2.bf16.msra.mxu0 0
    %159 = vmatprep.subr.bf16.mxu0 0
    %160 = vmatpush2.bf16.msra.mxu0 0
    %161 = vmatprep.mubr.bf16.mxu0 0
    %162 = vmatmul.mubr.bf16.gmra.mxu0 %v58
    %v163 = vpop.f32.mrf.mxu0
    %v164 = vadd.f32 %v80, %v163
    %v165 = vpop.f32.mrf.mxu0
    %v166 = vpop.f32.mrf.mxu0
    %v167 = vpop.f32.mrf.mxu0
    %168 = vdwg.mxu0
    %v169 = vmax.f32 %v164, 0.0
    %v170 = vpack.c.bf16 %v169, %v169
    %s171 = scalar_lea.vmem [#allocation5], 64
    %v172 = vld [vmem:[%s171] sm:$0xf]
    %v173 = vld [vmem:[%s171 + $0x4] sm:$0xf]
    %v174 = vld [vmem:[%s171 + $0x8] sm:$0xf]
    %v175 = vld [vmem:[%s171 + $0xc] sm:$0xf]
    %v176 = vld [vmem:[%s171 + $0x10] sm:$0xf]
    %v177 = vld [vmem:[%s171 + $0x14] sm:$0xf]
    %v178 = vld [vmem:[%s171 + $0x18] sm:$0xf]
    %v179 = vld [vmem:[%s171 + $0x1c] sm:$0xf]
    %v180 = vld [vmem:[%s171 + $0x20] sm:$0xf]
    %v181 = vld [vmem:[%s171 + $0x24] sm:$0xf]
    %v182 = vld [vmem:[%s171 + $0x28] sm:$0xf]
    %v183 = vld [vmem:[%s171 + $0x2c] sm:$0xf]
    %v184 = vld [vmem:[%s171 + $0x30] sm:$0xf]
    %v185 = vld [vmem:[%s171 + $0x34] sm:$0xf]
    %v186 = vld [vmem:[%s171 + $0x38] sm:$0xf]
    %v187 = vld [vmem:[%s171 + $0x3c] sm:$0xf]
    %v188 = vld [vmem:[#allocation7 + $0x1] sm:$0x1]
    %v189 = vlaneseq
    %v190 = vshrl.u32 %v189, 7
    %v191 = vsub.s32 0, %v190
    %v192 = vrot.slane %v188, %v191
    %v209 = vunpack.c.l.b16 %v172
    %v210 = vunpack.c.l.b16 %v173
    %v211 = vunpack.c.l.b16 %v174
    %v212 = vunpack.c.l.b16 %v175
    %v213 = vunpack.c.l.b16 %v176
    %v214 = vunpack.c.l.b16 %v177
    %v215 = vunpack.c.l.b16 %v178
    %v216 = vunpack.c.l.b16 %v179
    %v217 = vunpack.c.l.b16 %v180
    %v218 = vunpack.c.l.b16 %v181
    %v219 = vunpack.c.l.b16 %v182
    %v220 = vunpack.c.l.b16 %v183
    %v221 = vunpack.c.l.b16 %v184
    %v222 = vunpack.c.l.b16 %v185
    %v223 = vunpack.c.l.b16 %v186
    %v224 = vunpack.c.l.b16 %v187
    %v225 = vpack.c.b16 %v210, %v209
    %v226 = vpack.c.b16 %v212, %v211
    %v227 = vpack.c.b16 %v214, %v213
    %v228 = vpack.c.b16 %v216, %v215
    %v229 = vpack.c.b16 %v218, %v217
    %v230 = vpack.c.b16 %v220, %v219
    %v231 = vpack.c.b16 %v222, %v221
    %v232 = vpack.c.b16 %v224, %v223
    %241 = vmatprep.subr.bf16.mxu0 0
    %242 = vmatpush1.bf16.msra.mxu0 %v232
    %243 = vmatprep.subr.bf16.mxu0 0
    %244 = vmatpush1.bf16.msra.mxu0 %v231
    %245 = vmatprep.subr.bf16.mxu0 0
    %246 = vmatpush1.bf16.msra.mxu0 %v230
    %247 = vmatprep.subr.bf16.mxu0 0
    %248 = vmatpush1.bf16.msra.mxu0 %v229
    %249 = vmatprep.subr.bf16.mxu0 0
    %250 = vmatpush1.bf16.msra.mxu0 %v228
    %251 = vmatprep.subr.bf16.mxu0 0
    %252 = vmatpush1.bf16.msra.mxu0 %v227
    %253 = vmatprep.subr.bf16.mxu0 0
    %254 = vmatpush1.bf16.msra.mxu0 %v226
    %255 = vmatprep.subr.bf16.mxu0 0
    %256 = vmatpush1.bf16.msra.mxu0 %v225
    %257 = vmatprep.subr.bf16.mxu0 0
    %258 = vmatpush2.bf16.msra.mxu0 0
    %259 = vmatprep.subr.bf16.mxu0 0
    %260 = vmatpush2.bf16.msra.mxu0 0
    %261 = vmatprep.subr.bf16.mxu0 0
    %262 = vmatpush2.bf16.msra.mxu0 0
    %263 = vmatprep.subr.bf16.mxu0 0
    %264 = vmatpush2.bf16.msra.mxu0 0
    %265 = vmatprep.subr.bf16.mxu0 0
    %266 = vmatpush2.bf16.msra.mxu0 0
    %267 = vmatprep.subr.bf16.mxu0 0
    %268 = vmatpush2.bf16.msra.mxu0 0
    %269 = vmatprep.subr.bf16.mxu0 0
    %270 = vmatpush2.bf16.msra.mxu0 0
    %271 = vmatprep.subr.bf16.mxu0 0
    %272 = vmatpush2.bf16.msra.mxu0 0
    %273 = vmatprep.mubr.bf16.mxu0 0
    %274 = vmatmul.mubr.bf16.gmra.mxu0 %v170
    %v275 = vpop.f32.mrf.mxu0
    %v276 = vadd.f32 %v192, %v275
    %v277 = vpop.f32.mrf.mxu0
    %v278 = vpop.f32.mrf.mxu0
    %v279 = vpop.f32.mrf.mxu0
    %280 = vdwg.mxu0
    %v281 = vmax.f32 %v276, 0.0
    %v282 = vpack.c.bf16 %v281, %v281
    %s283 = scalar_lea.vmem [#allocation5], 128
    %v284 = vld [vmem:[%s283] sm:$0xf]
    %v285 = vld [vmem:[%s283 + $0x4] sm:$0xf]
    %v286 = vld [vmem:[%s283 + $0x8] sm:$0xf]
    %v287 = vld [vmem:[%s283 + $0xc] sm:$0xf]
    %v288 = vld [vmem:[%s283 + $0x10] sm:$0xf]
    %v289 = vld [vmem:[%s283 + $0x14] sm:$0xf]
    %v290 = vld [vmem:[%s283 + $0x18] sm:$0xf]
    %v291 = vld [vmem:[%s283 + $0x1c] sm:$0xf]
    %v292 = vld [vmem:[%s283 + $0x20] sm:$0xf]
    %v293 = vld [vmem:[%s283 + $0x24] sm:$0xf]
    %v294 = vld [vmem:[%s283 + $0x28] sm:$0xf]
    %v295 = vld [vmem:[%s283 + $0x2c] sm:$0xf]
    %v296 = vld [vmem:[%s283 + $0x30] sm:$0xf]
    %v297 = vld [vmem:[%s283 + $0x34] sm:$0xf]
    %v298 = vld [vmem:[%s283 + $0x38] sm:$0xf]
    %v299 = vld [vmem:[%s283 + $0x3c] sm:$0xf]
    %v300 = vld [vmem:[#allocation7 + $0x2] sm:$0x1]
    %v301 = vlaneseq
    %v302 = vshrl.u32 %v301, 7
    %v303 = vsub.s32 0, %v302
    %v304 = vrot.slane %v300, %v303
    %v321 = vunpack.c.l.b16 %v284
    %v322 = vunpack.c.l.b16 %v285
    %v323 = vunpack.c.l.b16 %v286
    %v324 = vunpack.c.l.b16 %v287
    %v325 = vunpack.c.l.b16 %v288
    %v326 = vunpack.c.l.b16 %v289
    %v327 = vunpack.c.l.b16 %v290
    %v328 = vunpack.c.l.b16 %v291
    %v329 = vunpack.c.l.b16 %v292
    %v330 = vunpack.c.l.b16 %v293
    %v331 = vunpack.c.l.b16 %v294
    %v332 = vunpack.c.l.b16 %v295
    %v333 = vunpack.c.l.b16 %v296
    %v334 = vunpack.c.l.b16 %v297
    %v335 = vunpack.c.l.b16 %v298
    %v336 = vunpack.c.l.b16 %v299
    %v337 = vpack.c.b16 %v322, %v321
    %v338 = vpack.c.b16 %v324, %v323
    %v339 = vpack.c.b16 %v326, %v325
    %v340 = vpack.c.b16 %v328, %v327
    %v341 = vpack.c.b16 %v330, %v329
    %v342 = vpack.c.b16 %v332, %v331
    %v343 = vpack.c.b16 %v334, %v333
    %v344 = vpack.c.b16 %v336, %v335
    %353 = vmatprep.subr.bf16.mxu0 0
    %354 = vmatpush1.bf16.msra.mxu0 %v344
    %355 = vmatprep.subr.bf16.mxu0 0
    %356 = vmatpush1.bf16.msra.mxu0 %v343
    %357 = vmatprep.subr.bf16.mxu0 0
    %358 = vmatpush1.bf16.msra.mxu0 %v342
    %359 = vmatprep.subr.bf16.mxu0 0
    %360 = vmatpush1.bf16.msra.mxu0 %v341
    %361 = vmatprep.subr.bf16.mxu0 0
    %362 = vmatpush1.bf16.msra.mxu0 %v340
    %363 = vmatprep.subr.bf16.mxu0 0
    %364 = vmatpush1.bf16.msra.mxu0 %v339
    %365 = vmatprep.subr.bf16.mxu0 0
    %366 = vmatpush1.bf16.msra.mxu0 %v338
    %367 = vmatprep.subr.bf16.mxu0 0
    %368 = vmatpush1.bf16.msra.mxu0 %v337
    %369 = vmatprep.subr.bf16.mxu0 0
    %370 = vmatpush2.bf16.msra.mxu0 0
    %371 = vmatprep.subr.bf16.mxu0 0
    %372 = vmatpush2.bf16.msra.mxu0 0
    %373 = vmatprep.subr.bf16.mxu0 0
    %374 = vmatpush2.bf16.msra.mxu0 0
    %375 = vmatprep.subr.bf16.mxu0 0
    %376 = vmatpush2.bf16.msra.mxu0 0
    %377 = vmatprep.subr.bf16.mxu0 0
    %378 = vmatpush2.bf16.msra.mxu0 0
    %379 = vmatprep.subr.bf16.mxu0 0
    %380 = vmatpush2.bf16.msra.mxu0 0
    %381 = vmatprep.subr.bf16.mxu0 0
    %382 = vmatpush2.bf16.msra.mxu0 0
    %383 = vmatprep.subr.bf16.mxu0 0
    %384 = vmatpush2.bf16.msra.mxu0 0
    %385 = vmatprep.mubr.bf16.mxu0 0
    %386 = vmatmul.mubr.bf16.gmra.mxu0 %v282
    %v387 = vpop.f32.mrf.mxu0
    %v388 = vadd.f32 %v304, %v387
    %v389 = vpop.f32.mrf.mxu0
    %v390 = vpop.f32.mrf.mxu0
    %v391 = vpop.f32.mrf.mxu0
    %392 = vdwg.mxu0
    %v393 = vmax.f32 %v388, 0.0
    %v394 = vpack.c.bf16 %v393, %v393
    %s395 = scalar_lea.vmem [#allocation5], 192
    %v396 = vld [vmem:[%s395] sm:$0xf]
    %v397 = vld [vmem:[%s395 + $0x4] sm:$0xf]
    %v398 = vld [vmem:[%s395 + $0x8] sm:$0xf]
    %v399 = vld [vmem:[%s395 + $0xc] sm:$0xf]
    %v400 = vld [vmem:[%s395 + $0x10] sm:$0xf]
    %v401 = vld [vmem:[%s395 + $0x14] sm:$0xf]
    %v402 = vld [vmem:[%s395 + $0x18] sm:$0xf]
    %v403 = vld [vmem:[%s395 + $0x1c] sm:$0xf]
    %v404 = vld [vmem:[%s395 + $0x20] sm:$0xf]
    %v405 = vld [vmem:[%s395 + $0x24] sm:$0xf]
    %v406 = vld [vmem:[%s395 + $0x28] sm:$0xf]
    %v407 = vld [vmem:[%s395 + $0x2c] sm:$0xf]
    %v408 = vld [vmem:[%s395 + $0x30] sm:$0xf]
    %v409 = vld [vmem:[%s395 + $0x34] sm:$0xf]
    %v410 = vld [vmem:[%s395 + $0x38] sm:$0xf]
    %v411 = vld [vmem:[%s395 + $0x3c] sm:$0xf]
    %v412 = vld [vmem:[#allocation7 + $0x3] sm:$0x1]
    %v413 = vlaneseq
    %v414 = vshrl.u32 %v413, 7
    %v415 = vsub.s32 0, %v414
    %v416 = vrot.slane %v412, %v415
    %v433 = vunpack.c.l.b16 %v396
    %v434 = vunpack.c.l.b16 %v397
    %v435 = vunpack.c.l.b16 %v398
    %v436 = vunpack.c.l.b16 %v399
    %v437 = vunpack.c.l.b16 %v400
    %v438 = vunpack.c.l.b16 %v401
    %v439 = vunpack.c.l.b16 %v402
    %v440 = vunpack.c.l.b16 %v403
    %v441 = vunpack.c.l.b16 %v404
    %v442 = vunpack.c.l.b16 %v405
    %v443 = vunpack.c.l.b16 %v406
    %v444 = vunpack.c.l.b16 %v407
    %v445 = vunpack.c.l.b16 %v408
    %v446 = vunpack.c.l.b16 %v409
    %v447 = vunpack.c.l.b16 %v410
    %v448 = vunpack.c.l.b16 %v411
    %v449 = vpack.c.b16 %v434, %v433
    %v450 = vpack.c.b16 %v436, %v435
    %v451 = vpack.c.b16 %v438, %v437
    %v452 = vpack.c.b16 %v440, %v439
    %v453 = vpack.c.b16 %v442, %v441
    %v454 = vpack.c.b16 %v444, %v443
    %v455 = vpack.c.b16 %v446, %v445
    %v456 = vpack.c.b16 %v448, %v447
    %465 = vmatprep.subr.bf16.mxu0 0
    %466 = vmatpush1.bf16.msra.mxu0 %v456
    %467 = vmatprep.subr.bf16.mxu0 0
    %468 = vmatpush1.bf16.msra.mxu0 %v455
    %469 = vmatprep.subr.bf16.mxu0 0
    %470 = vmatpush1.bf16.msra.mxu0 %v454
    %471 = vmatprep.subr.bf16.mxu0 0
    %472 = vmatpush1.bf16.msra.mxu0 %v453
    %473 = vmatprep.subr.bf16.mxu0 0
    %474 = vmatpush1.bf16.msra.mxu0 %v452
    %475 = vmatprep.subr.bf16.mxu0 0
    %476 = vmatpush1.bf16.msra.mxu0 %v451
    %477 = vmatprep.subr.bf16.mxu0 0
    %478 = vmatpush1.bf16.msra.mxu0 %v450
    %479 = vmatprep.subr.bf16.mxu0 0
    %480 = vmatpush1.bf16.msra.mxu0 %v449
    %481 = vmatprep.subr.bf16.mxu0 0
    %482 = vmatpush2.bf16.msra.mxu0 0
    %483 = vmatprep.subr.bf16.mxu0 0
    %484 = vmatpush2.bf16.msra.mxu0 0
    %485 = vmatprep.subr.bf16.mxu0 0
    %486 = vmatpush2.bf16.msra.mxu0 0
    %487 = vmatprep.subr.bf16.mxu0 0
    %488 = vmatpush2.bf16.msra.mxu0 0
    %489 = vmatprep.subr.bf16.mxu0 0
    %490 = vmatpush2.bf16.msra.mxu0 0
    %491 = vmatprep.subr.bf16.mxu0 0
    %492 = vmatpush2.bf16.msra.mxu0 0
    %493 = vmatprep.subr.bf16.mxu0 0
    %494 = vmatpush2.bf16.msra.mxu0 0
    %495 = vmatprep.subr.bf16.mxu0 0
    %496 = vmatpush2.bf16.msra.mxu0 0
    %497 = vmatprep.mubr.bf16.mxu0 0
    %498 = vmatmul.mubr.bf16.gmra.mxu0 %v394
    %v499 = vpop.f32.mrf.mxu0
    %v500 = vadd.f32 %v416, %v499
    %v501 = vpop.f32.mrf.mxu0
    %v502 = vpop.f32.mrf.mxu0
    %v503 = vpop.f32.mrf.mxu0
    %504 = vdwg.mxu0
    %v505 = vmax.f32 %v500, 0.0
    %v506 = vpack.c.bf16 %v505, %v505
    %s507 = scalar_lea.vmem [#allocation5], 256
    %v508 = vld [vmem:[%s507] sm:$0xf]
    %v509 = vld [vmem:[%s507 + $0x4] sm:$0xf]
    %v510 = vld [vmem:[%s507 + $0x8] sm:$0xf]
    %v511 = vld [vmem:[%s507 + $0xc] sm:$0xf]
    %v512 = vld [vmem:[%s507 + $0x10] sm:$0xf]
    %v513 = vld [vmem:[%s507 + $0x14] sm:$0xf]
    %v514 = vld [vmem:[%s507 + $0x18] sm:$0xf]
    %v515 = vld [vmem:[%s507 + $0x1c] sm:$0xf]
    %v516 = vld [vmem:[%s507 + $0x20] sm:$0xf]
    %v517 = vld [vmem:[%s507 + $0x24] sm:$0xf]
    %v518 = vld [vmem:[%s507 + $0x28] sm:$0xf]
    %v519 = vld [vmem:[%s507 + $0x2c] sm:$0xf]
    %v520 = vld [vmem:[%s507 + $0x30] sm:$0xf]
    %v521 = vld [vmem:[%s507 + $0x34] sm:$0xf]
    %v522 = vld [vmem:[%s507 + $0x38] sm:$0xf]
    %v523 = vld [vmem:[%s507 + $0x3c] sm:$0xf]
    %v524 = vld [vmem:[#allocation7 + $0x4] sm:$0x1]
    %v525 = vlaneseq
    %v526 = vshrl.u32 %v525, 7
    %v527 = vsub.s32 0, %v526
    %v528 = vrot.slane %v524, %v527
    %v545 = vunpack.c.l.b16 %v508
    %v546 = vunpack.c.l.b16 %v509
    %v547 = vunpack.c.l.b16 %v510
    %v548 = vunpack.c.l.b16 %v511
    %v549 = vunpack.c.l.b16 %v512
    %v550 = vunpack.c.l.b16 %v513
    %v551 = vunpack.c.l.b16 %v514
    %v552 = vunpack.c.l.b16 %v515
    %v553 = vunpack.c.l.b16 %v516
    %v554 = vunpack.c.l.b16 %v517
    %v555 = vunpack.c.l.b16 %v518
    %v556 = vunpack.c.l.b16 %v519
    %v557 = vunpack.c.l.b16 %v520
    %v558 = vunpack.c.l.b16 %v521
    %v559 = vunpack.c.l.b16 %v522
    %v560 = vunpack.c.l.b16 %v523
    %v561 = vpack.c.b16 %v546, %v545
    %v562 = vpack.c.b16 %v548, %v547
    %v563 = vpack.c.b16 %v550, %v549
    %v564 = vpack.c.b16 %v552, %v551
    %v565 = vpack.c.b16 %v554, %v553
    %v566 = vpack.c.b16 %v556, %v555
    %v567 = vpack.c.b16 %v558, %v557
    %v568 = vpack.c.b16 %v560, %v559
    %577 = vmatprep.subr.bf16.mxu0 0
    %578 = vmatpush1.bf16.msra.mxu0 %v568
    %579 = vmatprep.subr.bf16.mxu0 0
    %580 = vmatpush1.bf16.msra.mxu0 %v567
    %581 = vmatprep.subr.bf16.mxu0 0
    %582 = vmatpush1.bf16.msra.mxu0 %v566
    %583 = vmatprep.subr.bf16.mxu0 0
    %584 = vmatpush1.bf16.msra.mxu0 %v565
    %585 = vmatprep.subr.bf16.mxu0 0
    %586 = vmatpush1.bf16.msra.mxu0 %v564
    %587 = vmatprep.subr.bf16.mxu0 0
    %588 = vmatpush1.bf16.msra.mxu0 %v563
    %589 = vmatprep.subr.bf16.mxu0 0
    %590 = vmatpush1.bf16.msra.mxu0 %v562
    %591 = vmatprep.subr.bf16.mxu0 0
    %592 = vmatpush1.bf16.msra.mxu0 %v561
    %593 = vmatprep.subr.bf16.mxu0 0
    %594 = vmatpush2.bf16.msra.mxu0 0
    %595 = vmatprep.subr.bf16.mxu0 0
    %596 = vmatpush2.bf16.msra.mxu0 0
    %597 = vmatprep.subr.bf16.mxu0 0
    %598 = vmatpush2.bf16.msra.mxu0 0
    %599 = vmatprep.subr.bf16.mxu0 0
    %600 = vmatpush2.bf16.msra.mxu0 0
    %601 = vmatprep.subr.bf16.mxu0 0
    %602 = vmatpush2.bf16.msra.mxu0 0
    %603 = vmatprep.subr.bf16.mxu0 0
    %604 = vmatpush2.bf16.msra.mxu0 0
    %605 = vmatprep.subr.bf16.mxu0 0
    %606 = vmatpush2.bf16.msra.mxu0 0
    %607 = vmatprep.subr.bf16.mxu0 0
    %608 = vmatpush2.bf16.msra.mxu0 0
    %609 = vmatprep.mubr.bf16.mxu0 0
    %610 = vmatmul.mubr.bf16.gmra.mxu0 %v506
    %v611 = vpop.f32.mrf.mxu0
    %v612 = vadd.f32 %v528, %v611
    %v613 = vpop.f32.mrf.mxu0
    %v614 = vpop.f32.mrf.mxu0
    %v615 = vpop.f32.mrf.mxu0
    %616 = vdwg.mxu0
    %v617 = vmax.f32 %v612, 0.0
    %618 = vst [vmem:[#allocation8] sm:$0xff] %v617
    // Predicated region
    $region26: #{forward_pallas.1} parent=1 // pred_check
      _
    $region27: #{forward_pallas.1} parent=1 // pred_check_branch
      %620 = sbr.rel (0) target = $region29
    $region28: #{forward_pallas.1} parent=1 // pred_region
      %s622 = ssub.s32 128, 128
      %623 = vsyncadd [#allocation4], %s622
      %s625 = sshll.u32 [#allocation8], 4
      %s626 = int_to_ptr.vmem [resolvable:$true] %s625
      %628 = dma.vmem_to_hbm [thread:$0]  %s626, 128, %s3, [#allocation4]
    $region29: #{forward_pallas.1} parent=1 // pred_fallthru
      _
    // Predicated region
    $region30: #{forward_pallas.1} parent=1 // pred_check
      _
    $region31: #{forward_pallas.1} parent=1 // pred_check_branch
      %630 = sbr.rel (0) target = $region33
    $region32: #{forward_pallas.1} parent=1 // pred_region
      %631 = dma.done [#allocation4], 128
    $region33: #{forward_pallas.1} parent=1 // pred_fallthru
      _
    %632 = vsyncpa [#allocation3], 1
    %633 = vsyncpa [#allocation6], 1
    %634 = vsyncpa [#allocation4], 1

</llo_original>
